<compile_context>
chip_gen: v7x
topology: tpu7x:2x2x1
jax: 0.10.0
libtpu: 0.0.40
codegen_flags: <defaults>
</compile_context>

<pallas_src>
import jax
import jax.numpy as jnp
import numpy as np
from jax.experimental import pallas as pl
from jax.experimental.pallas import tpu as pltpu


def mlp_kernel(x_ref, w1_ref, b1_ref, w2_ref, b2_ref, o_ref):
    # x_ref:  (TILE_N, H)        w1_ref: (H, M) bf16   b1_ref: (1, M) f32
    # w2_ref: (M, H) bf16        b2_ref: (1, H) f32    o_ref:  (TILE_N, H)
    x = x_ref[...].astype(jnp.bfloat16)

    # fc1: bf16 MXU matmul, f32 accumulation; bias add + ReLU in f32 on the VPU.
    h = jnp.dot(x, w1_ref[...], preferred_element_type=jnp.float32)
    h = jnp.maximum(h + b1_ref[...], 0.0)

    # dropout(rate) -> identity at inference time.
    # TODO(synk): training-mode dropout (pltpu.prng_random_bits mask) not emitted.

    # fc2: bf16 MXU matmul, f32 accumulation; bias add in f32, single final downcast.
    y = jnp.dot(h.astype(jnp.bfloat16), w2_ref[...], preferred_element_type=jnp.float32)
    y = y + b2_ref[...]

    o_ref[...] = y.astype(o_ref.dtype)


def mlp_pallas(x, w1, b1, w2, b2, *, tile_n=256, vmem_limit_bytes=48 << 20):
    """x: (N, hidden); w1: (hidden, mlp_dim); b1: (mlp_dim,);
       w2: (mlp_dim, hidden); b2: (hidden,).
       tile_n: row-tile size (rows processed per grid step)."""
    N, H = x.shape
    M = w1.shape[1]

    # Pick a sublane-friendly row tile: multiple of 8, or the full extent.
    tile_n = min(tile_n, N)
    if tile_n != N and tile_n % 8 != 0:
        tile_n = max(8, (tile_n // 8) * 8)
    grid_n = pl.cdiv(N, tile_n)

    # Weights in bf16 (halves VMEM/HBM weight traffic, feeds MXU at bf16 peak);
    # biases kept in f32 for the epilogue.
    w1_bf16 = w1.astype(jnp.bfloat16)
    w2_bf16 = w2.astype(jnp.bfloat16)
    b1_2d = b1.reshape(1, M).astype(jnp.float32)
    b2_2d = b2.reshape(1, H).astype(jnp.float32)

    itemsize = jnp.dtype(x.dtype).itemsize
    cost = pl.CostEstimate(
        flops=4 * N * H * M,  # 2*N*H*M per matmul, two matmuls
        transcendentals=0,
        bytes_accessed=(N * H * itemsize            # x in
                        + N * H * itemsize          # out
                        + 2 * H * M * 2             # w1 + w2 in bf16
                        + (M + H) * 4),             # biases in f32
    )

    grid_spec = pltpu.PrefetchScalarGridSpec(
        num_scalar_prefetch=0,
        grid=(grid_n,),
        in_specs=[
            pl.BlockSpec((tile_n, H), lambda i: (i, 0)),  # x row tile
            pl.BlockSpec((H, M), lambda i: (0, 0)),       # w1 (VMEM-resident)
            pl.BlockSpec((1, M), lambda i: (0, 0)),       # b1
            pl.BlockSpec((M, H), lambda i: (0, 0)),       # w2 (VMEM-resident)
            pl.BlockSpec((1, H), lambda i: (0, 0)),       # b2
        ],
        out_specs=pl.BlockSpec((tile_n, H), lambda i: (i, 0)),
    )

    return pl.pallas_call(
        mlp_kernel,
        out_shape=jax.ShapeDtypeStruct((N, H), x.dtype),
        grid_spec=grid_spec,
        compiler_params=pltpu.CompilerParams(
            dimension_semantics=("parallel",),
            vmem_limit_bytes=vmem_limit_bytes,
        ),
        cost_estimate=cost,
    )(x, w1_bf16, b1_2d, w2_bf16, b2_2d)


def _xavier_uniform(key, shape, dtype=jnp.float32):
    # matches torch.nn.init.xavier_uniform_ for a Linear weight (fan_out, fan_in)
    fan_out, fan_in = shape
    limit = float(np.sqrt(6.0 / (fan_in + fan_out)))
    return jax.random.uniform(key, shape, dtype, minval=-limit, maxval=limit)


if __name__ == "__main__":
    # Small but lane-dense config (H, M multiples of 128); N not a multiple of the
    # row tile so the cdiv/padded-last-block path is exercised.
    batch, seq, hidden_size, mlp_dim = 2, 10, 128, 256   # N = 20 rows

    key = jax.random.PRNGKey(0)
    kx, kw1, kb1, kw2, kb2 = jax.random.split(key, 5)

    # input: (batch, seq, hidden) as a transformer token stream
    x = jax.random.normal(kx, (batch, seq, hidden_size), dtype=jnp.float32)

    # deterministic parameter init mirroring _init_weights()
    # PyTorch Linear stores weight as (out, in); transpose to (in, out) for the kernel.
    w1_t = _xavier_uniform(kw1, (mlp_dim, hidden_size))              # fc1.weight
    b1 = 1e-6 * jax.random.normal(kb1, (mlp_dim,), jnp.float32)      # fc1.bias
    w2_t = _xavier_uniform(kw2, (hidden_size, mlp_dim))              # fc2.weight
    b2 = 1e-6 * jax.random.normal(kb2, (hidden_size,), jnp.float32)  # fc2.bias

    w1 = w1_t.T  # (hidden, mlp_dim)
    w2 = w2_t.T  # (mlp_dim, hidden)

    # flatten tokens -> rows for the kernel, restore shape afterwards
    x2d = x.reshape(batch * seq, hidden_size)
    # tile_n=16 -> grid of 2 row tiles, last tile partially filled (4 rows padded out).
    out2d = mlp_pallas(x2d, w1, b1, w2, b2, tile_n=16)
    out = out2d.reshape(batch, seq, hidden_size)
    jax.block_until_ready(out)

    # reference check in plain JAX f32 (inference-mode dropout = identity).
    # Tolerance loosened vs f32 since the kernel runs bf16 matmuls with f32 accumulation.
    ref = jnp.maximum(x2d @ w1 + b1, 0.0) @ w2 + b2
    np.testing.assert_allclose(np.asarray(out2d), np.asarray(ref), rtol=3e-2, atol=3e-2)

    print("KERNEL_OK")
</pallas_src>

<mosaic_0001>
module attributes {stable_mosaic.version = 11 : i64} {
  func.func @mlp_kernel(%arg0: i32, %arg1: memref<16x128xf32, #tpu.memory_space<vmem>>, %arg2: memref<128x256xbf16, #tpu.memory_space<vmem>>, %arg3: memref<1x256xf32, #tpu.memory_space<vmem>>, %arg4: memref<256x128xbf16, #tpu.memory_space<vmem>>, %arg5: memref<1x128xf32, #tpu.memory_space<vmem>>, %arg6: memref<16x128xf32, #tpu.memory_space<vmem>>) attributes {dimension_semantics = [#tpu.dimension_semantics<parallel>], iteration_bounds = array<i64: 2>, scalar_prefetch = 0 : i64, scratch_operands = 0 : i64, tpu.core_type = #tpu.core_type<tc>, window_params = [{transform_indices = @transform_0, window_bounds = array<i64: 16, 128>}, {pipeline_mode = #tpu.pipeline_mode<synchronous>, transform_indices = @transform_1, window_bounds = array<i64: 128, 256>}, {pipeline_mode = #tpu.pipeline_mode<synchronous>, transform_indices = @transform_2, window_bounds = array<i64: 1, 256>}, {pipeline_mode = #tpu.pipeline_mode<synchronous>, transform_indices = @transform_3, window_bounds = array<i64: 256, 128>}, {pipeline_mode = #tpu.pipeline_mode<synchronous>, transform_indices = @transform_4, window_bounds = array<i64: 1, 128>}, {transform_indices = @transform_5, window_bounds = array<i64: 16, 128>}]} {
    %c0 = arith.constant 0 : index
    %c0_0 = arith.constant 0 : index
    %0 = vector.load %arg1[%c0, %c0_0] : memref<16x128xf32, #tpu.memory_space<vmem>>, vector<16x128xf32>
    %1 = arith.truncf %0 : vector<16x128xf32> to vector<16x128xbf16>
    %c0_1 = arith.constant 0 : index
    %c0_2 = arith.constant 0 : index
    %2 = vector.load %arg2[%c0_1, %c0_2] : memref<128x256xbf16, #tpu.memory_space<vmem>>, vector<128x256xbf16>
    %cst = arith.constant dense<0.000000e+00> : vector<16x256xf32>
    %3 = tpu.matmul %1, %2, %cst {dimension_numbers = #tpu.dot_dimension_numbers<[1], [0], [0], [1], [0, 0, 1, 1], [], []>} : vector<16x128xbf16>, vector<128x256xbf16>, vector<16x256xf32> -> vector<16x256xf32>
    %c0_3 = arith.constant 0 : index
    %c0_4 = arith.constant 0 : index
    %4 = vector.load %arg3[%c0_3, %c0_4] : memref<1x256xf32, #tpu.memory_space<vmem>>, vector<1x256xf32>
    %5 = vector.broadcast %4 : vector<1x256xf32> to vector<16x256xf32>
    %6 = arith.addf %3, %5 : vector<16x256xf32>
    %cst_5 = arith.constant 0.000000e+00 : f32
    %7 = vector.broadcast %cst_5 : f32 to vector<16x256xf32>
    %8 = arith.maximumf %6, %7 : vector<16x256xf32>
    %9 = arith.truncf %8 : vector<16x256xf32> to vector<16x256xbf16>
    %c0_6 = arith.constant 0 : index
    %c0_7 = arith.constant 0 : index
    %10 = vector.load %arg4[%c0_6, %c0_7] : memref<256x128xbf16, #tpu.memory_space<vmem>>, vector<256x128xbf16>
    %cst_8 = arith.constant dense<0.000000e+00> : vector<16x128xf32>
    %11 = tpu.matmul %9, %10, %cst_8 {dimension_numbers = #tpu.dot_dimension_numbers<[1], [0], [0], [1], [0, 0, 1, 1], [], []>} : vector<16x256xbf16>, vector<256x128xbf16>, vector<16x128xf32> -> vector<16x128xf32>
    %c0_9 = arith.constant 0 : index
    %c0_10 = arith.constant 0 : index
    %12 = vector.load %arg5[%c0_9, %c0_10] : memref<1x128xf32, #tpu.memory_space<vmem>>, vector<1x128xf32>
    %13 = vector.broadcast %12 : vector<1x128xf32> to vector<16x128xf32>
    %14 = arith.addf %11, %13 : vector<16x128xf32>
    %c0_11 = arith.constant 0 : index
    %c0_12 = arith.constant 0 : index
    %15 = vector.load %arg6[%c0_11, %c0_12] : memref<16x128xf32, #tpu.memory_space<vmem>>, vector<16x128xf32>
    tpu.vector_store %arg6[%c0_11, %c0_12], %14 {strides = array<i32>} : memref<16x128xf32, #tpu.memory_space<vmem>>, vector<16x128xf32>,
    return
  }
  func.func @transform_0(%arg0: i32) -> (i32, i32) {
    %c0_i32 = arith.constant 0 : i32
    %c0_i32_0 = arith.constant 0 : i32
    return %arg0, %c0_i32 : i32, i32
  }
  func.func @transform_1(%arg0: i32) -> (i32, i32) {
    %c0_i32 = arith.constant 0 : i32
    %c0_i32_0 = arith.constant 0 : i32
    %c0_i32_1 = arith.constant 0 : i32
    return %c0_i32, %c0_i32_0 : i32, i32
  }
  func.func @transform_2(%arg0: i32) -> (i32, i32) {
    %c0_i32 = arith.constant 0 : i32
    %c0_i32_0 = arith.constant 0 : i32
    %c0_i32_1 = arith.constant 0 : i32
    return %c0_i32, %c0_i32_0 : i32, i32
  }
  func.func @transform_3(%arg0: i32) -> (i32, i32) {
    %c0_i32 = arith.constant 0 : i32
    %c0_i32_0 = arith.constant 0 : i32
    %c0_i32_1 = arith.constant 0 : i32
    return %c0_i32, %c0_i32_0 : i32, i32
  }
  func.func @transform_4(%arg0: i32) -> (i32, i32) {
    %c0_i32 = arith.constant 0 : i32
    %c0_i32_0 = arith.constant 0 : i32
    %c0_i32_1 = arith.constant 0 : i32
    return %c0_i32, %c0_i32_0 : i32, i32
  }
  func.func @transform_5(%arg0: i32) -> (i32, i32) {
    %c0_i32 = arith.constant 0 : i32
    %c0_i32_0 = arith.constant 0 : i32
    return %arg0, %c0_i32 : i32, i32
  }
}

</mosaic_0001>

<llo_original>
// kernel: tpu_custom_call.1
$region0: #{tpu_custom_call.1}
  #allocation0 [shape = 'u32[]', space=smem, size = 0x4, offset = 0x4, fixed_abs, tag = 'smem constant byte address 0x4 - core index']
  #allocation1 [shape = 'u32[144,128]{1,0:T(1,128)}', space=vmem, size = 0x12000, scoped, tag = 'internal scratch']
  %s0 = inlined_call_operand.hbm [shape: f32[20,128], index: 0, kind: input, shape index: {}]
  %s1 = inlined_call_operand.hbm [shape: bf16[128,256], index: 1, kind: input, shape index: {}]
  %s2 = inlined_call_operand.vmem [shape: f32[1,256], index: 2, kind: input, shape index: {}]
  %s3 = inlined_call_operand.hbm [shape: bf16[256,128], index: 3, kind: input, shape index: {}]
  %s4 = inlined_call_operand.vmem [shape: f32[1,128], index: 4, kind: input, shape index: {}]
  %s5 = inlined_call_operand.hbm [shape: f32[20,128], index: 5, kind: output, shape index: {}]
  %s6 = sld [smem:[#allocation0]]
  $region65: #{tpu_custom_call.1} parent=0
    _
  %s8 = ssub.s32 1, %s6
  %s9 = scalar_select 0, %s8, %s6
  $region1: #{tpu_custom_call.1} parent=0
    #allocation2 [shape = 'u8[16384]{0}', space=vmem, size = 0x4000, scoped, tag = 'input window, operand 0']
    #allocation3 [shape = 's32[2]{0}', space=sflag, size = 0x8, scoped, tag = 'scoped memory for tpu_custom_call.1']
    #allocation4 [shape = 's32[2]{0}', space=sflag, size = 0x8, scoped, tag = 'scoped memory for tpu_custom_call.1']
    #allocation5 [shape = 'u8[65536]{0}', space=vmem, size = 0x10000, scoped, tag = 'input window, operand 1, single buffered']
    #allocation6 [shape = 's32[1]{0}', space=sflag, size = 0x4, scoped, tag = 'scoped memory for tpu_custom_call.1']
    #allocation7 [shape = 'u8[65536]{0}', space=vmem, size = 0x10000, scoped, tag = 'input window, operand 3, single buffered']
    #allocation8 [shape = 'u8[16384]{0}', space=vmem, size = 0x4000, scoped, tag = 'output window, operand 0']
    %10 = vsyncpa [#allocation3], 0
    %s11 = scalar_lea.sflag [#allocation3], 1
    %12 = vsyncpa %s11, 0
    %13 = vsyncpa [#allocation6], 0
    %14 = vsyncpa [#allocation4], 0
    %s15 = scalar_lea.sflag [#allocation4], 1
    %16 = vsyncpa %s15, 0
    loop: start=0, step=1, limit=4
    $region2: #{tpu_custom_call.1} parent=1 // loop_pre_header
      _
    $region3: #{tpu_custom_call.1} parent=1 // loop_header
      %s18 = sphi 0, %s22
      %p19 = scmp.ge.s32.totalorder %s18, 4
      %s28 = sphi 0, %s30
      %s31 = sphi 0, %s28
      %s32 = sphi 0, %s31
      %s48 = sphi 0, %s32
      %s52 = sphi 0, %s52
      %s54 = sphi 0, %s52
      %s55 = sphi 0, %s54
      %s69 = sphi 0, %s55
      %s73 = sphi 0, %s73
      %s75 = sphi 0, %s73
      %s76 = sphi 0, %s75
      %s90 = sphi 0, %s76
      %s94 = sphi 0, %s94
      %s96 = sphi 0, %s94
      %s97 = sphi 0, %s96
      %s111 = sphi 0, %s97
      %s115 = sphi 0, %s115
      %s117 = sphi 0, %s115
      %s118 = sphi 0, %s117
      %s132 = sphi 0, %s118
      %s138 = sphi 0, %s140
      %s141 = sphi 0, %s138
      %s142 = sphi 0, %s141
      %s158 = sphi 0, %s142
    $region4: #{tpu_custom_call.1} parent=1 // loop_header_branch
      %21 = sbr.rel (%p19) target = $region8
    $region5: #{tpu_custom_call.1} parent=1 // loop_body
      %s23 = ssub.s32 %s18, 1
      %s24 = ssub.s32 %s18, 2
      %s25 = sadd.s32 %s18, 1
      %s26 = ssub.s32 %s18, %s25
      %p27 = scmp.eq.s32.totalorder %s26, 0
      %s29 = sadd.s32 %s28, 1
      %s30 = scalar_select %p27, %s28, %s29
      %p33 = pneg %p27
      %p34 = scmp.eq.s32.totalorder %s18, 1
      %p35 = por %p33, %p34
      %p36 = scmp.ne.s32.totalorder %s28, %s31
      %p37 = scmp.eq.s32.totalorder %s18, 0
      %p38 = por %p36, %p37
      %p39 = scmp.ne.s32.totalorder %s28, %s31
      %p40 = scmp.eq.s32.totalorder %s23, 1
      %p41 = por %p39, %p40
      %p42 = scmp.ne.s32.totalorder %s31, %s32
      %p43 = scmp.eq.s32.totalorder %s23, 0
      %p44 = por %p42, %p43
      %p45 = scmp.ne.s32.totalorder %s31, %s32
      %p46 = scmp.eq.s32.totalorder %s24, 1
      %p47 = por %p45, %p46
      %p49 = scmp.ne.s32.totalorder %s32, %s48
      %p50 = scmp.eq.s32.totalorder %s24, 0
      %p51 = por %p49, %p50
      %s53 = sadd.s32 %s52, 1
      %p56 = scmp.eq.s32.totalorder %s18, 1
      %p57 = scmp.ne.s32.totalorder %s52, %s54
      %p58 = scmp.eq.s32.totalorder %s18, 0
      %p59 = por %p57, %p58
      %p60 = scmp.ne.s32.totalorder %s52, %s54
      %p61 = scmp.eq.s32.totalorder %s23, 1
      %p62 = por %p60, %p61
      %p63 = scmp.ne.s32.totalorder %s54, %s55
      %p64 = scmp.eq.s32.totalorder %s23, 0
      %p65 = por %p63, %p64
      %p66 = scmp.ne.s32.totalorder %s54, %s55
      %p67 = scmp.eq.s32.totalorder %s24, 1
      %p68 = por %p66, %p67
      %p70 = scmp.ne.s32.totalorder %s55, %s69
      %p71 = scmp.eq.s32.totalorder %s24, 0
      %p72 = por %p70, %p71
      %s74 = sadd.s32 %s73, 1
      %p77 = scmp.eq.s32.totalorder %s18, 1
      %p78 = scmp.ne.s32.totalorder %s73, %s75
      %p79 = scmp.eq.s32.totalorder %s18, 0
      %p80 = por %p78, %p79
      %p81 = scmp.ne.s32.totalorder %s73, %s75
      %p82 = scmp.eq.s32.totalorder %s23, 1
      %p83 = por %p81, %p82
      %p84 = scmp.ne.s32.totalorder %s75, %s76
      %p85 = scmp.eq.s32.totalorder %s23, 0
      %p86 = por %p84, %p85
      %p87 = scmp.ne.s32.totalorder %s75, %s76
      %p88 = scmp.eq.s32.totalorder %s24, 1
      %p89 = por %p87, %p88
      %p91 = scmp.ne.s32.totalorder %s76, %s90
      %p92 = scmp.eq.s32.totalorder %s24, 0
      %p93 = por %p91, %p92
      %s95 = sadd.s32 %s94, 1
      %p98 = scmp.eq.s32.totalorder %s18, 1
      %p99 = scmp.ne.s32.totalorder %s94, %s96
      %p100 = scmp.eq.s32.totalorder %s18, 0
      %p101 = por %p99, %p100
      %p102 = scmp.ne.s32.totalorder %s94, %s96
      %p103 = scmp.eq.s32.totalorder %s23, 1
      %p104 = por %p102, %p103
      %p105 = scmp.ne.s32.totalorder %s96, %s97
      %p106 = scmp.eq.s32.totalorder %s23, 0
      %p107 = por %p105, %p106
      %p108 = scmp.ne.s32.totalorder %s96, %s97
      %p109 = scmp.eq.s32.totalorder %s24, 1
      %p110 = por %p108, %p109
      %p112 = scmp.ne.s32.totalorder %s97, %s111
      %p113 = scmp.eq.s32.totalorder %s24, 0
      %p114 = por %p112, %p113
      %s116 = sadd.s32 %s115, 1
      %p119 = scmp.eq.s32.totalorder %s18, 1
      %p120 = scmp.ne.s32.totalorder %s115, %s117
      %p121 = scmp.eq.s32.totalorder %s18, 0
      %p122 = por %p120, %p121
      %p123 = scmp.ne.s32.totalorder %s115, %s117
      %p124 = scmp.eq.s32.totalorder %s23, 1
      %p125 = por %p123, %p124
      %p126 = scmp.ne.s32.totalorder %s117, %s118
      %p127 = scmp.eq.s32.totalorder %s23, 0
      %p128 = por %p126, %p127
      %p129 = scmp.ne.s32.totalorder %s117, %s118
      %p130 = scmp.eq.s32.totalorder %s24, 1
      %p131 = por %p129, %p130
      %p133 = scmp.ne.s32.totalorder %s118, %s132
      %p134 = scmp.eq.s32.totalorder %s24, 0
      %p135 = por %p133, %p134
      %s136 = ssub.s32 %s18, %s25
      %p137 = scmp.eq.s32.totalorder %s136, 0
      %s139 = sadd.s32 %s138, 1
      %s140 = scalar_select %p137, %s138, %s139
      %p143 = pneg %p137
      %p144 = scmp.eq.s32.totalorder %s18, 1
      %p145 = por %p143, %p144
      %p146 = scmp.ne.s32.totalorder %s138, %s141
      %p147 = scmp.eq.s32.totalorder %s18, 0
      %p148 = por %p146, %p147
      %p149 = scmp.ne.s32.totalorder %s138, %s141
      %p150 = scmp.eq.s32.totalorder %s23, 1
      %p151 = por %p149, %p150
      %p152 = scmp.ne.s32.totalorder %s141, %s142
      %p153 = scmp.eq.s32.totalorder %s23, 0
      %p154 = por %p152, %p153
      %p155 = scmp.ne.s32.totalorder %s141, %s142
      %p156 = scmp.eq.s32.totalorder %s24, 1
      %p157 = por %p155, %p156
      %p159 = scmp.ne.s32.totalorder %s142, %s158
      %p160 = scmp.eq.s32.totalorder %s24, 0
      %p161 = por %p159, %p160
      %p162 = scmp.le.s32.totalorder 1, %s18
      %p163 = scmp.lt.s32.totalorder %s18, 3
      %p164 = pnand %p162, %p163
      %p165 = pneg %p164
      // Predicated region
      $region9: #{tpu_custom_call.1} parent=5 // pred_check
        _
      $region10: #{tpu_custom_call.1} parent=5 // pred_check_branch
        %167 = sbr.rel (%p164) target = $region12
      $region11: #{tpu_custom_call.1} parent=5 // pred_region
        %s168 = ssub.s32 %s18, 1
        // Predicated region
        $region13: #{tpu_custom_call.1} parent=11 // pred_check
          %p169 = pneg %p65
        $region14: #{tpu_custom_call.1} parent=11 // pred_check_branch
          %171 = sbr.rel (%p169) target = $region16
        $region15: #{tpu_custom_call.1} parent=11 // pred_region
          %s173 = ssub.s32 2048, 2048
          %174 = vsyncadd [#allocation6], %s173
          %s175 = sshll.u32 [#allocation5], 4
          %s176 = int_to_ptr.vmem [resolvable:$true] %s175
          %181 = dma.hbm_to_vmem [thread:$0]  %s1, 2048, %s176, [#allocation6], 128, 128, 8
        $region16: #{tpu_custom_call.1} parent=11 // pred_fallthru
          _
        // Predicated region
        $region17: #{tpu_custom_call.1} parent=11 // pred_check
          %p182 = pneg %p86
        $region18: #{tpu_custom_call.1} parent=11 // pred_check_branch
          %184 = sbr.rel (%p182) target = $region20
        $region19: #{tpu_custom_call.1} parent=11 // pred_region
          _
        $region20: #{tpu_custom_call.1} parent=11 // pred_fallthru
          _
        // Predicated region
        $region21: #{tpu_custom_call.1} parent=11 // pred_check
          %p185 = pneg %p107
        $region22: #{tpu_custom_call.1} parent=11 // pred_check_branch
          %187 = sbr.rel (%p185) target = $region24
        $region23: #{tpu_custom_call.1} parent=11 // pred_region
          %s189 = ssub.s32 2048, 2048
          %190 = vsyncadd [#allocation6], %s189
          %s191 = sshll.u32 [#allocation7], 4
          %s192 = int_to_ptr.vmem [resolvable:$true] %s191
          %197 = dma.hbm_to_vmem [thread:$0]  %s3, 2048, %s192, [#allocation6], 64, 64, 4
        $region24: #{tpu_custom_call.1} parent=11 // pred_fallthru
          _
        // Predicated region
        $region25: #{tpu_custom_call.1} parent=11 // pred_check
          %p198 = pneg %p128
        $region26: #{tpu_custom_call.1} parent=11 // pred_check_branch
          %200 = sbr.rel (%p198) target = $region28
        $region27: #{tpu_custom_call.1} parent=11 // pred_region
          _
        $region28: #{tpu_custom_call.1} parent=11 // pred_fallthru
          _
      $region12: #{tpu_custom_call.1} parent=5 // pred_fallthru
        _
      %p201 = scmp.lt.s32.totalorder %s18, 2
      // Predicated region
      $region29: #{tpu_custom_call.1} parent=5 // pred_check
        %p202 = pneg %p201
      $region30: #{tpu_custom_call.1} parent=5 // pred_check_branch
        %204 = sbr.rel (%p202) target = $region32
      $region31: #{tpu_custom_call.1} parent=5 // pred_region
        // Predicated region
        $region33: #{tpu_custom_call.1} parent=31 // pred_check
          %p205 = pneg %p38
        $region34: #{tpu_custom_call.1} parent=31 // pred_check_branch
          %207 = sbr.rel (%p205) target = $region36
        $region35: #{tpu_custom_call.1} parent=31 // pred_region
          %s208 = sand.u32 %s28, 1
          %s209 = scalar_lea.sflag [#allocation3], %s208
          %s210 = sand.u32 %s28, 1
          %s211 = smul.addr %s210, 16
          %s212 = scalar_lea.vmem [#allocation2], %s211
          %s213 = smul.u32 2, %s18
          %s214 = ssub.s32 3, %s213
          %p215 = scmp.lt.s32.totalorder %s214, 2
          %s216 = scalar_select %p215, %s214, 2
          %s217 = smul.u32 128, %s216
          %s219 = ssub.s32 256, %s217
          %220 = vsyncadd %s209, %s219
          %p221 = scmp.ne.s32.totalorder 0, %s217
          %s222 = smul.addr %s213, 128
          %s223 = scalar_lea.hbm %s0, %s222
          %s224 = smul.u32 8, %s216
          %s225 = sshll.u32 %s212, 4
          %s226 = int_to_ptr.vmem [resolvable:$true] %s225
          %s227 = sshll.u32 %s224, 4
          %231 = dma.hbm_to_vmem [thread:$0]  (%p221), %s223, %s227, %s226, %s209, 128, 128, 8
        $region36: #{tpu_custom_call.1} parent=31 // pred_fallthru
          _
      $region32: #{tpu_custom_call.1} parent=5 // pred_fallthru
        _
      %p232 = scmp.le.s32.totalorder 1, %s18
      %p233 = scmp.lt.s32.totalorder %s18, 3
      %p234 = pnand %p232, %p233
      %p235 = pneg %p234
      // Predicated region
      $region37: #{tpu_custom_call.1} parent=5 // pred_check
        _
      $region38: #{tpu_custom_call.1} parent=5 // pred_check_branch
        %237 = sbr.rel (%p234) target = $region40
      $region39: #{tpu_custom_call.1} parent=5 // pred_region
        %s238 = ssub.s32 %s18, 1
        %s239 = sand.u32 %s31, 1
        %s240 = scalar_lea.sflag [#allocation3], %s239
        %s241 = sand.u32 %s31, 1
        %s242 = smul.addr %s241, 16
        %s243 = scalar_lea.vmem [#allocation2], %s242
        // Predicated region
        $region41: #{tpu_custom_call.1} parent=39 // pred_check
          %p244 = pneg %p44
        $region42: #{tpu_custom_call.1} parent=39 // pred_check_branch
          %246 = sbr.rel (%p244) target = $region44
        $region43: #{tpu_custom_call.1} parent=39 // pred_region
          %247 = dma.done %s240, 256
        $region44: #{tpu_custom_call.1} parent=39 // pred_fallthru
          _
        // Predicated region
        $region45: #{tpu_custom_call.1} parent=39 // pred_check
          %p248 = pneg %p65
        $region46: #{tpu_custom_call.1} parent=39 // pred_check_branch
          %250 = sbr.rel (%p248) target = $region48
        $region47: #{tpu_custom_call.1} parent=39 // pred_region
          %251 = dma.done [#allocation6], 2048
        $region48: #{tpu_custom_call.1} parent=39 // pred_fallthru
          _
        // Predicated region
        $region49: #{tpu_custom_call.1} parent=39 // pred_check
          %p252 = pneg %p107
        $region50: #{tpu_custom_call.1} parent=39 // pred_check_branch
          %254 = sbr.rel (%p252) target = $region52
        $region51: #{tpu_custom_call.1} parent=39 // pred_region
          %255 = dma.done [#allocation6], 2048
        $region52: #{tpu_custom_call.1} parent=39 // pred_fallthru
          _
        %s256 = sand.u32 %s31, 1
        %s257 = scalar_lea.sflag [#allocation3], %s256
        %s258 = sand.u32 %s31, 1
        %s259 = smul.addr %s258, 16
        %s260 = scalar_lea.vmem [#allocation2], %s259
        %p261 = pneg %p44
        %p262 = pneg %p41
        %p263 = pneg %p65
        %p264 = pneg %p62
        %p265 = pneg %p86
        %p266 = pneg %p83
        %p267 = pneg %p107
        %p268 = pneg %p104
        %p269 = pneg %p128
        %p270 = pneg %p125
        %p271 = pneg %p154
        %p272 = pneg %p151
        %s273 = sand.u32 %s141, 1
        %s274 = scalar_lea.sflag [#allocation4], %s273
        %s275 = sand.u32 %s141, 1
        %s276 = smul.addr %s275, 16
        %s277 = scalar_lea.vmem [#allocation8], %s276
        %s278 = smul.u32 2, %s23
        %s279 = ssub.s32 3, %s278
        %p280 = scmp.lt.s32.totalorder %s279, 2
        %s281 = scalar_select %p280, %s279, 2
        %s282 = smul.u32 128, %s281
        %s283 = smul.u32 2, %s23
        %s284 = ssub.s32 3, %s283
        %p285 = scmp.lt.s32.totalorder %s284, 2
        %s286 = scalar_select %p285, %s284, 2
        %s287 = smul.u32 128, %s286
        %v289 = vld [vmem:[%s243] sm:$0xff]
        %v290 = vld [vmem:[%s243 + $0x8] sm:$0xff]
        %v291 = vpack.c.bf16 %v290, %v289
        %v292 = vld [vmem:[#allocation5] sm:$0xff]
        %v293 = vld [vmem:[#allocation5 + $0x8] sm:$0xff]
        %v294 = vld [vmem:[#allocation5 + $0x10] sm:$0xff]
        %v295 = vld [vmem:[#allocation5 + $0x18] sm:$0xff]
        %v296 = vld [vmem:[#allocation5 + $0x20] sm:$0xff]
        %v297 = vld [vmem:[#allocation5 + $0x28] sm:$0xff]
        %v298 = vld [vmem:[#allocation5 + $0x30] sm:$0xff]
        %v299 = vld [vmem:[#allocation5 + $0x38] sm:$0xff]
        %v300 = vld [vmem:[#allocation5 + $0x40] sm:$0xff]
        %v301 = vld [vmem:[#allocation5 + $0x48] sm:$0xff]
        %v302 = vld [vmem:[#allocation5 + $0x50] sm:$0xff]
        %v303 = vld [vmem:[#allocation5 + $0x58] sm:$0xff]
        %v304 = vld [vmem:[#allocation5 + $0x60] sm:$0xff]
        %v305 = vld [vmem:[#allocation5 + $0x68] sm:$0xff]
        %v306 = vld [vmem:[#allocation5 + $0x70] sm:$0xff]
        %v307 = vld [vmem:[#allocation5 + $0x78] sm:$0xff]
        %v308 = vld [vmem:[%s2] sm:$0x3]
        %v310 = vlaneseq
        %v311 = vshrl.u32 %v310, 7
        %v312 = vsub.s32 0, %v311
        %v313 = vrot.slane %v308, %v312
        %v314 = vlaneseq
        %v315 = vshrl.u32 %v314, 7
        %v316 = vsub.s32 1, %v315
        %v317 = vrot.slane %v308, %v316
        %v336 = vunpack.c.l.b16 %v292
        %v337 = vunpack.c.h.b16 %v292
        %v338 = vunpack.c.l.b16 %v293
        %v339 = vunpack.c.h.b16 %v293
        %v340 = vunpack.c.l.b16 %v294
        %v341 = vunpack.c.h.b16 %v294
        %v342 = vunpack.c.l.b16 %v295
        %v343 = vunpack.c.h.b16 %v295
        %v344 = vunpack.c.l.b16 %v296
        %v345 = vunpack.c.h.b16 %v296
        %v346 = vunpack.c.l.b16 %v297
        %v347 = vunpack.c.h.b16 %v297
        %v348 = vunpack.c.l.b16 %v298
        %v349 = vunpack.c.h.b16 %v298
        %v350 = vunpack.c.l.b16 %v299
        %v351 = vunpack.c.h.b16 %v299
        %v352 = vunpack.c.l.b16 %v300
        %v353 = vunpack.c.h.b16 %v300
        %v354 = vunpack.c.l.b16 %v301
        %v355 = vunpack.c.h.b16 %v301
        %v356 = vunpack.c.l.b16 %v302
        %v357 = vunpack.c.h.b16 %v302
        %v358 = vunpack.c.l.b16 %v303
        %v359 = vunpack.c.h.b16 %v303
        %v360 = vunpack.c.l.b16 %v304
        %v361 = vunpack.c.h.b16 %v304
        %v362 = vunpack.c.l.b16 %v305
        %v363 = vunpack.c.h.b16 %v305
        %v364 = vunpack.c.l.b16 %v306
        %v365 = vunpack.c.h.b16 %v306
        %v366 = vunpack.c.l.b16 %v307
        %v367 = vunpack.c.h.b16 %v307
        %v368 = vpack.c.b16 %v338, %v336
        %v369 = vpack.c.b16 %v339, %v337
        %v370 = vpack.c.b16 %v342, %v340
        %v371 = vpack.c.b16 %v343, %v341
        %v372 = vpack.c.b16 %v346, %v344
        %v373 = vpack.c.b16 %v347, %v345
        %v374 = vpack.c.b16 %v350, %v348
        %v375 = vpack.c.b16 %v351, %v349
        %v376 = vpack.c.b16 %v354, %v352
        %v377 = vpack.c.b16 %v355, %v353
        %v378 = vpack.c.b16 %v358, %v356
        %v379 = vpack.c.b16 %v359, %v357
        %v380 = vpack.c.b16 %v362, %v360
        %v381 = vpack.c.b16 %v363, %v361
        %v382 = vpack.c.b16 %v366, %v364
        %v383 = vpack.c.b16 %v367, %v365
        %400 = vmatprep.subr.bf16.mxu0 %v369
        %401 = vmatpush1.bf16.msra.mxu0 %v368
        %402 = vmatprep.subr.bf16.mxu0 %v371
        %403 = vmatpush1.bf16.msra.mxu0 %v370
        %404 = vmatprep.subr.bf16.mxu0 %v373
        %405 = vmatpush1.bf16.msra.mxu0 %v372
        %406 = vmatprep.subr.bf16.mxu0 %v375
        %407 = vmatpush1.bf16.msra.mxu0 %v374
        %408 = vmatprep.subr.bf16.mxu0 %v377
        %409 = vmatpush1.bf16.msra.mxu0 %v376
        %410 = vmatprep.subr.bf16.mxu0 %v379
        %411 = vmatpush1.bf16.msra.mxu0 %v378
        %412 = vmatprep.subr.bf16.mxu0 %v381
        %413 = vmatpush1.bf16.msra.mxu0 %v380
        %414 = vmatprep.subr.bf16.mxu0 %v383
        %415 = vmatpush1.bf16.msra.mxu0 %v382
        %416 = vmatprep.subr.bf16.mxu0 0
        %417 = vmatpush1.bf16.msra.mxu0 0
        %418 = vmatprep.subr.bf16.mxu0 0
        %419 = vmatpush1.bf16.msra.mxu0 0
        %420 = vmatprep.subr.bf16.mxu0 0
        %421 = vmatpush1.bf16.msra.mxu0 0
        %422 = vmatprep.subr.bf16.mxu0 0
        %423 = vmatpush1.bf16.msra.mxu0 0
        %424 = vmatprep.subr.bf16.mxu0 0
        %425 = vmatpush1.bf16.msra.mxu0 0
        %426 = vmatprep.subr.bf16.mxu0 0
        %427 = vmatpush1.bf16.msra.mxu0 0
        %428 = vmatprep.subr.bf16.mxu0 0
        %429 = vmatpush1.bf16.msra.mxu0 0
        %430 = vmatprep.subr.bf16.mxu0 0
        %431 = vmatpush1.bf16.msra.mxu0 0
        %432 = vmatprep.mubr.bf16.mxu0 0
        %433 = vmatmul.mubr.bf16.gmra.mrb[0].mxu0 %v291
        %v434 = vpop.f32.mrb[0].mxu0
        %v435 = vadd.f32 %v313, %v434
        %v436 = vpop.f32.mrb[0].mxu0
        %v437 = vadd.f32 %v317, %v436
        %v438 = vpop.f32.mrb[0].mxu0
        %v439 = vadd.f32 %v313, %v438
        %v440 = vpop.f32.mrb[0].mxu0
        %v441 = vadd.f32 %v317, %v440
        %442 = vdwg.mxu0
        %v443 = vmax.f32 %v435, 0.0
        %v444 = vmax.f32 %v437, 0.0
        %v445 = vmax.f32 %v439, 0.0
        %v446 = vmax.f32 %v441, 0.0
        %v447 = vpack.c.bf16 %v445, %v443
        %v448 = vpack.c.bf16 %v446, %v444
        %v449 = vld [vmem:[#allocation7] sm:$0xf]
        %v450 = vld [vmem:[#allocation7 + $0x4] sm:$0xf]
        %v451 = vld [vmem:[#allocation7 + $0x8] sm:$0xf]
        %v452 = vld [vmem:[#allocation7 + $0xc] sm:$0xf]
        %v453 = vld [vmem:[#allocation7 + $0x10] sm:$0xf]
        %v454 = vld [vmem:[#allocation7 + $0x14] sm:$0xf]
        %v455 = vld [vmem:[#allocation7 + $0x18] sm:$0xf]
        %v456 = vld [vmem:[#allocation7 + $0x1c] sm:$0xf]
        %v457 = vld [vmem:[#allocation7 + $0x20] sm:$0xf]
        %v458 = vld [vmem:[#allocation7 + $0x24] sm:$0xf]
        %v459 = vld [vmem:[#allocation7 + $0x28] sm:$0xf]
        %v460 = vld [vmem:[#allocation7 + $0x2c] sm:$0xf]
        %v461 = vld [vmem:[#allocation7 + $0x30] sm:$0xf]
        %v462 = vld [vmem:[#allocation7 + $0x34] sm:$0xf]
        %v463 = vld [vmem:[#allocation7 + $0x38] sm:$0xf]
        %v464 = vld [vmem:[#allocation7 + $0x3c] sm:$0xf]
        %v465 = vld [vmem:[#allocation7 + $0x40] sm:$0xf]
        %v466 = vld [vmem:[#allocation7 + $0x44] sm:$0xf]
        %v467 = vld [vmem:[#allocation7 + $0x48] sm:$0xf]
        %v468 = vld [vmem:[#allocation7 + $0x4c] sm:$0xf]
        %v469 = vld [vmem:[#allocation7 + $0x50] sm:$0xf]
        %v470 = vld [vmem:[#allocation7 + $0x54] sm:$0xf]
        %v471 = vld [vmem:[#allocation7 + $0x58] sm:$0xf]
        %v472 = vld [vmem:[#allocation7 + $0x5c] sm:$0xf]
        %v473 = vld [vmem:[#allocation7 + $0x60] sm:$0xf]
        %v474 = vld [vmem:[#allocation7 + $0x64] sm:$0xf]
        %v475 = vld [vmem:[#allocation7 + $0x68] sm:$0xf]
        %v476 = vld [vmem:[#allocation7 + $0x6c] sm:$0xf]
        %v477 = vld [vmem:[#allocation7 + $0x70] sm:$0xf]
        %v478 = vld [vmem:[#allocation7 + $0x74] sm:$0xf]
        %v479 = vld [vmem:[#allocation7 + $0x78] sm:$0xf]
        %v480 = vld [vmem:[#allocation7 + $0x7c] sm:$0xf]
        %v481 = vld [vmem:[%s4] sm:$0x1]
        %v483 = vlaneseq
        %v484 = vshrl.u32 %v483, 7
        %v485 = vsub.s32 0, %v484
        %v486 = vrot.slane %v481, %v485
        %v520 = vunpack.c.l.b16 %v449
        %v521 = vunpack.c.l.b16 %v450
        %v522 = vunpack.c.l.b16 %v451
        %v523 = vunpack.c.l.b16 %v452
        %v524 = vunpack.c.l.b16 %v453
        %v525 = vunpack.c.l.b16 %v454
        %v526 = vunpack.c.l.b16 %v455
        %v527 = vunpack.c.l.b16 %v456
        %v528 = vunpack.c.l.b16 %v457
        %v529 = vunpack.c.l.b16 %v458
        %v530 = vunpack.c.l.b16 %v459
        %v531 = vunpack.c.l.b16 %v460
        %v532 = vunpack.c.l.b16 %v461
        %v533 = vunpack.c.l.b16 %v462
        %v534 = vunpack.c.l.b16 %v463
        %v535 = vunpack.c.l.b16 %v464
        %v536 = vunpack.c.l.b16 %v465
        %v537 = vunpack.c.l.b16 %v466
        %v538 = vunpack.c.l.b16 %v467
        %v539 = vunpack.c.l.b16 %v468
        %v540 = vunpack.c.l.b16 %v469
        %v541 = vunpack.c.l.b16 %v470
        %v542 = vunpack.c.l.b16 %v471
        %v543 = vunpack.c.l.b16 %v472
        %v544 = vunpack.c.l.b16 %v473
        %v545 = vunpack.c.l.b16 %v474
        %v546 = vunpack.c.l.b16 %v475
        %v547 = vunpack.c.l.b16 %v476
        %v548 = vunpack.c.l.b16 %v477
        %v549 = vunpack.c.l.b16 %v478
        %v550 = vunpack.c.l.b16 %v479
        %v551 = vunpack.c.l.b16 %v480
        %v552 = vpack.c.b16 %v521, %v520
        %v553 = vpack.c.b16 %v523, %v522
        %v554 = vpack.c.b16 %v525, %v524
        %v555 = vpack.c.b16 %v527, %v526
        %v556 = vpack.c.b16 %v529, %v528
        %v557 = vpack.c.b16 %v531, %v530
        %v558 = vpack.c.b16 %v533, %v532
        %v559 = vpack.c.b16 %v535, %v534
        %v560 = vpack.c.b16 %v537, %v536
        %v561 = vpack.c.b16 %v539, %v538
        %v562 = vpack.c.b16 %v541, %v540
        %v563 = vpack.c.b16 %v543, %v542
        %v564 = vpack.c.b16 %v545, %v544
        %v565 = vpack.c.b16 %v547, %v546
        %v566 = vpack.c.b16 %v549, %v548
        %v567 = vpack.c.b16 %v551, %v550
        %584 = vmatprep.subr.bf16.mxu0 0
        %585 = vmatpush1.bf16.msra.mxu0 %v552
        %586 = vmatprep.subr.bf16.mxu0 0
        %587 = vmatpush1.bf16.msra.mxu0 %v553
        %588 = vmatprep.subr.bf16.mxu0 0
        %589 = vmatpush1.bf16.msra.mxu0 %v554
        %590 = vmatprep.subr.bf16.mxu0 0
        %591 = vmatpush1.bf16.msra.mxu0 %v555
        %592 = vmatprep.subr.bf16.mxu0 0
        %593 = vmatpush1.bf16.msra.mxu0 %v556
        %594 = vmatprep.subr.bf16.mxu0 0
        %595 = vmatpush1.bf16.msra.mxu0 %v557
        %596 = vmatprep.subr.bf16.mxu0 0
        %597 = vmatpush1.bf16.msra.mxu0 %v558
        %598 = vmatprep.subr.bf16.mxu0 0
        %599 = vmatpush1.bf16.msra.mxu0 %v559
        %600 = vmatprep.subr.bf16.mxu0 0
        %601 = vmatpush1.bf16.msra.mxu0 %v560
        %602 = vmatprep.subr.bf16.mxu0 0
        %603 = vmatpush1.bf16.msra.mxu0 %v561
        %604 = vmatprep.subr.bf16.mxu0 0
        %605 = vmatpush1.bf16.msra.mxu0 %v562
        %606 = vmatprep.subr.bf16.mxu0 0
        %607 = vmatpush1.bf16.msra.mxu0 %v563
        %608 = vmatprep.subr.bf16.mxu0 0
        %609 = vmatpush1.bf16.msra.mxu0 %v564
        %610 = vmatprep.subr.bf16.mxu0 0
        %611 = vmatpush1.bf16.msra.mxu0 %v565
        %612 = vmatprep.subr.bf16.mxu0 0
        %613 = vmatpush1.bf16.msra.mxu0 %v566
        %614 = vmatprep.subr.bf16.mxu0 0
        %615 = vmatpush1.bf16.msra.mxu0 %v567
        %616 = vmatprep.mubr.bf16.mxu0 %v448
        %617 = vmatmul.mubr.bf16.gmra.mrb[0].mxu0 %v447
        %v618 = vpop.f32.mrb[0].mxu0
        %v619 = vadd.f32 %v486, %v618
        %v620 = vpop.f32.mrb[0].mxu0
        %v621 = vpop.f32.mrb[0].mxu0
        %v622 = vadd.f32 %v486, %v621
        %v623 = vpop.f32.mrb[0].mxu0
        %624 = vdwg.mxu0
        %625 = vst [vmem:[%s277] sm:$0xff] %v619
        %626 = vst [vmem:[%s277 + $0x8] sm:$0xff] %v622
        %s627 = sand.u32 %s141, 1
        %s628 = scalar_lea.sflag [#allocation4], %s627
        %s629 = sand.u32 %s141, 1
        %s630 = smul.addr %s629, 16
        %s631 = scalar_lea.vmem [#allocation8], %s630
        // Predicated region
        $region53: #{tpu_custom_call.1} parent=39 // pred_check
          %p632 = pneg %p151
        $region54: #{tpu_custom_call.1} parent=39 // pred_check_branch
          %634 = sbr.rel (%p632) target = $region56
        $region55: #{tpu_custom_call.1} parent=39 // pred_region
          %s635 = smul.u32 2, %s23
          %s636 = ssub.s32 3, %s635
          %p637 = scmp.lt.s32.totalorder %s636, 2
          %s638 = scalar_select %p637, %s636, 2
          %s639 = smul.u32 128, %s638
          %s641 = ssub.s32 256, %s639
          %642 = vsyncadd %s628, %s641
          %p643 = scmp.ne.s32.totalorder 0, %s639
          %s644 = smul.addr %s635, 128
          %s645 = scalar_lea.hbm %s5, %s644
          %s646 = smul.u32 8, %s638
          %s647 = sshll.u32 %s631, 4
          %s648 = int_to_ptr.vmem [resolvable:$true] %s647
          %s649 = sshll.u32 %s646, 4
          %653 = dma.vmem_to_hbm [thread:$0]  (%p643), %s648, %s649, %s645, %s628, 128, 128, 8
        $region56: #{tpu_custom_call.1} parent=39 // pred_fallthru
          _
      $region40: #{tpu_custom_call.1} parent=5 // pred_fallthru
        _
      %p654 = scmp.le.s32.totalorder 2, %s18
      // Predicated region
      $region57: #{tpu_custom_call.1} parent=5 // pred_check
        %p655 = pneg %p654
      $region58: #{tpu_custom_call.1} parent=5 // pred_check_branch
        %657 = sbr.rel (%p655) target = $region60
      $region59: #{tpu_custom_call.1} parent=5 // pred_region
        %s658 = ssub.s32 %s18, 2
        // Predicated region
        $region61: #{tpu_custom_call.1} parent=59 // pred_check
          %p659 = pneg %p157
        $region62: #{tpu_custom_call.1} parent=59 // pred_check_branch
          %661 = sbr.rel (%p659) target = $region64
        $region63: #{tpu_custom_call.1} parent=59 // pred_region
          %s662 = sand.u32 %s142, 1
          %s663 = scalar_lea.sflag [#allocation4], %s662
          %s664 = sand.u32 %s142, 1
          %s665 = smul.addr %s664, 16
          %s666 = scalar_lea.vmem [#allocation8], %s665
          %667 = dma.done %s663, 256
        $region64: #{tpu_custom_call.1} parent=59 // pred_fallthru
          _
      $region60: #{tpu_custom_call.1} parent=5 // pred_fallthru
        _
    $region6: #{tpu_custom_call.1} parent=1 // loop_footer
      %s22 = sadd.s32 1, %s18
    $region7: #{tpu_custom_call.1} parent=1 // loop_footer_branch
      %17 = sbr.rel target = $region3
    $region8: #{tpu_custom_call.1} parent=1 // loop_exit
      _
    %668 = vsyncpa [#allocation3], 1
    %s669 = scalar_lea.sflag [#allocation3], 1
    %670 = vsyncpa %s669, 1
    %671 = vsyncpa [#allocation6], 1
    %672 = vsyncpa [#allocation4], 1
    %s673 = scalar_lea.sflag [#allocation4], 1
    %674 = vsyncpa %s673, 1

</llo_original>
